<compile_context>
chip_gen: v7x
topology: tpu7x:2x2x1
jax: 0.10.0
libtpu: 0.0.40
codegen_flags: <defaults>
</compile_context>

<pallas_src>
import functools
import math

import jax
import jax.numpy as jnp
import numpy as np
from jax import lax
from jax.experimental import pallas as pl
from jax.experimental.pallas import tpu as pltpu


def _layer_norm(x, w, b, eps=1e-5):
    # PyTorch nn.LayerNorm semantics (biased variance over last dim), f32.
    mu = jnp.mean(x, axis=-1, keepdims=True)
    var = jnp.mean((x - mu) ** 2, axis=-1, keepdims=True)
    return (x - mu) * lax.rsqrt(var + eps) * w + b


def block_kernel(q_ref, k_ref, wqt_ref, wkvt_ref,
                 ln1w_ref, ln1b_ref, ln2w_ref, ln2b_ref,
                 w1t_ref, b1_ref, w2t_ref, b2_ref,
                 out_ref, *, seq_len, batches_per_tile, num_units, exact_recip):
    f32 = jnp.float32
    U = num_units
    bpt = batches_per_tile

    q = q_ref[...]                        # (tile_r, Dq) compute dtype
    k = k_ref[...]                        # (tile_r, Dk) input dtype (f32)
    tile_r = q.shape[0]

    wq = wqt_ref[...]                     # (Dq, U); 1/sqrt(key_dim) pre-folded
    cdt = wq.dtype                        # compute dtype (bf16 or f32)

    def mm(x, w):
        # compute-dtype MXU operands, f32 accumulation.
        return jnp.dot(x.astype(cdt), w, preferred_element_type=f32)

    # ---- MultiHeadAttention, h == 1 (scaled dot product, no proj biases) ----
    Q = mm(q, wq)                         # (tile_r, U) f32 (scale folded in)
    kv = mm(k, wkvt_ref[...])             # (tile_r, 2U) f32, fused K/V (N = 2U)
    K = kv[:, :U]
    V = kv[:, U:]

    Qc, Kc, Vc = Q.astype(cdt), K.astype(cdt), V.astype(cdt)
    if bpt > 1:
        # Batched attention: (bpt, T, T) scores; no off-diagonal waste, no mask.
        Qb = Qc.reshape(bpt, seq_len, U)
        Kb = Kc.reshape(bpt, seq_len, U)
        Vb = Vc.reshape(bpt, seq_len, U)
        s = jnp.einsum("bqd,bkd->bqk", Qb, Kb, preferred_element_type=f32)
    else:
        s = lax.dot_general(Qc, Kc, (((1,), (1,)), ((), ())),
                            preferred_element_type=f32)

    s = s - jnp.max(s, axis=-1, keepdims=True)
    p = jnp.exp(s)
    denom = jnp.sum(p, axis=-1, keepdims=True)
    if exact_recip:
        p = p / denom                               # exact divide on f32 path
    else:
        p = p * pl.reciprocal(denom, approx=True)   # EUP slot, frees VALU

    if bpt > 1:
        attn = jnp.einsum("bqk,bkd->bqd", p.astype(cdt), Vb,
                          preferred_element_type=f32).reshape(tile_r, U)
    else:
        attn = jnp.dot(p.astype(cdt), Vc, preferred_element_type=f32)

    # ---- Block body ----
    ln1w, ln1b = ln1w_ref[...], ln1b_ref[...]
    ln2w, ln2b = ln2w_ref[...], ln2b_ref[...]
    b1, b2 = b1_ref[...], b2_ref[...]

    out = _layer_norm(attn, ln1w, ln1b)                            # LN1, f32
    t = mm(out, w2t_ref[...]) + b2 + _layer_norm(out, ln2w, ln2b)  # L2(out)+LN2(out)
    t = mm(t, w1t_ref[...]) + b1                                   # L1 (+ eval dropout = id)
    t = t + k.astype(f32)                                          # residual with f32 keys
    res = mm(t, w1t_ref[...]) + b1                                 # L1 again
    out_ref[...] = res.astype(out_ref.dtype)


def _num_tensorcores():
    """Dual-TensorCore parts (v4 megacore, v7x) vs single-TC (v5e/v6e)."""
    try:
        kind = jax.devices()[0].device_kind.lower()
    except Exception:
        return 1
    return 2 if any(t in kind for t in ("v4", "v7", "7x")) else 1


def _vmem_capacity_bytes():
    try:
        cap = int(pltpu.get_tpu_info().vmem_capacity_bytes)
        if cap > 0:
            return cap
    except Exception:
        pass
    try:
        kind = jax.devices()[0].device_kind.lower()
        if any(t in kind for t in ("v7", "7x")):
            return 64 * 1024 * 1024
    except Exception:
        pass
    return 128 * 1024 * 1024


def _max_tile_rows(T, num_units, out_dim, Dq, Dk, cdt_bytes, vmem_bytes):
    """Largest row tile whose in-kernel temporaries fit a conservative VMEM
    budget: per-row scores/probs (2 * T f32 each), ~9 dense f32 row temps
    (Q/K/V/attn/LN outputs/tails) and double-buffered I/O tiles.  Weights and
    pipeline headroom get the remaining 3/4 of capacity."""
    f32 = 4
    per_row = f32 * (5 * num_units + 4 * out_dim + 4 * T)
    per_row += 2 * (Dq * cdt_bytes + Dk * f32 + out_dim * f32)
    budget = int(vmem_bytes * 0.25)
    return max(T, budget // max(per_row, 1))


def _pick_batches_per_tile(B, T, *, row_multiple, max_rows, num_cores):
    """How many batch elements to fold into one row tile.

    Constraints: the tile holds a whole number of batch elements (attention
    stays batch-local), divides B, and its row count is a multiple of the
    compute-dtype sublane packing (8 f32 / 16 bf16 / 32 int8) unless it covers
    the whole array.  Preference: fit the VMEM-derived row cap; on dual-TC
    parts give both TensorCores balanced non-trivial (>=128-row) work; on
    single-TC parts extra grid steps are pure overhead so bigger is better.
    """
    cands = [d for d in range(1, B + 1)
             if B % d == 0 and ((d * T) % row_multiple == 0 or d == B)]

    def score(d):
        rows = d * T
        steps = B // d
        fits = rows <= max_rows
        if num_cores >= 2:
            shard = steps % num_cores == 0 and rows >= min(128, max_rows)
        else:
            shard = True
        size_key = rows if fits else -rows   # nothing fits -> smallest tile
        return (fits, shard, size_key)

    return max(cands, key=score)


def _vmem_limit_bytes(tile_r, T, bpt, Dq, Dk, U, out_dim, cdt_bytes, vmem_cap):
    """Scoped-VMEM request derived from the actual block sizes + headroom."""
    f32 = 4
    io = 2 * tile_r * (Dq * cdt_bytes + Dk * f32 + out_dim * f32)
    weights = ((Dq * U + Dk * 2 * U + 2 * U * out_dim) * cdt_bytes
               + (4 * U + 2 * out_dim) * f32)
    temps = (5 * tile_r * U + 4 * tile_r * out_dim + 2 * bpt * T * T) * f32
    need = io + 2 * weights + temps
    return int(min(0.8 * vmem_cap, max(16 * 2 ** 20, 2 * need)))


def _const_param_spec(shape):
    """Constant-index parameter tile: never re-fetched, so single-buffer it
    when the installed Pallas exposes pipeline_mode (saves VMEM on v7x)."""
    index_map = lambda i: (0, 0)
    if hasattr(pl, "Buffered"):
        try:
            return pl.BlockSpec(shape, index_map, pipeline_mode=pl.Buffered(1))
        except TypeError:
            pass
    return pl.BlockSpec(shape, index_map)


def block_forward(query, keys, params, *, num_units, key_dim, h,
                  compute_dtype=jnp.bfloat16, out_dtype=None):
    assert h == 1, "Block.forward only type-checks for h == 1 (see header)."
    B, T, Dq = query.shape
    Bk, Tk, Dk = keys.shape
    assert (B, T) == (Bk, Tk)
    out_dim = num_units * h
    assert Dk == out_dim, "residual `out + keys` requires key_dim == num_units*h"
    R = B * T
    out_dtype = query.dtype if out_dtype is None else out_dtype

    cdt_bytes = jnp.dtype(compute_dtype).itemsize
    row_multiple = {4: 8, 2: 16, 1: 32}.get(cdt_bytes, 8)
    num_cores = _num_tensorcores()
    vmem_cap = _vmem_capacity_bytes()
    max_rows = _max_tile_rows(T, num_units, out_dim, Dq, Dk, cdt_bytes, vmem_cap)

    bpt = _pick_batches_per_tile(B, T, row_multiple=row_multiple,
                                 max_rows=max_rows, num_cores=num_cores)
    tile_r = bpt * T
    grid = (B // bpt,)

    # Fold batch into the sublane (row) axis; features stay on lanes.  Query
    # only feeds the Q projection -> cast host-side; keys also feed the f32
    # residual -> keep full precision, cast per-matmul inside the kernel.
    q2 = query.reshape(R, Dq).astype(compute_dtype)
    k2 = keys.reshape(R, Dk)

    f32 = jnp.float32
    scale = 1.0 / math.sqrt(key_dim)
    # Pre-transpose (no in-kernel .T), fold softmax scale into Wq, fuse K/V.
    wqT = (params["Wq"].T * scale).astype(compute_dtype)             # (Dq, U)
    wkvT = jnp.concatenate([params["Wk"].T, params["Wv"].T],
                           axis=1).astype(compute_dtype)             # (Dk, 2U)
    w1T = params["W1"].T.astype(compute_dtype)                       # (U, out_dim)
    w2T = params["W2"].T.astype(compute_dtype)                       # (U, out_dim)
    ln1w, ln1b = params["ln1_w"].astype(f32), params["ln1_b"].astype(f32)
    ln2w, ln2b = params["ln2_w"].astype(f32), params["ln2_b"].astype(f32)
    b1, b2 = params["b1"].astype(f32), params["b2"].astype(f32)

    kernel = functools.partial(
        block_kernel, seq_len=T, batches_per_tile=bpt, num_units=num_units,
        exact_recip=(jnp.dtype(compute_dtype) == jnp.dtype(jnp.float32)))

    in_specs = [
        pl.BlockSpec((tile_r, Dq), lambda i: (i, 0)),     # query row tile
        pl.BlockSpec((tile_r, Dk), lambda i: (i, 0)),     # keys row tile (same rows)
        _const_param_spec((Dq, num_units)),               # Wq^T (scaled)
        _const_param_spec((Dk, 2 * num_units)),           # [Wk^T | Wv^T]
        _const_param_spec((1, num_units)),                # LN1 weight
        _const_param_spec((1, num_units)),                # LN1 bias
        _const_param_spec((1, num_units)),                # LN2 weight
        _const_param_spec((1, num_units)),                # LN2 bias
        _const_param_spec((num_units, out_dim)),          # W1^T (linear_layer1)
        _const_param_spec((1, out_dim)),                  # b1
        _const_param_spec((num_units, out_dim)),          # W2^T (linear_layer2)
        _const_param_spec((1, out_dim)),                  # b2
    ]
    out_specs = pl.BlockSpec((tile_r, out_dim), lambda i: (i, 0))

    vmem_limit = _vmem_limit_bytes(tile_r, T, bpt, Dq, Dk, num_units, out_dim,
                                   cdt_bytes, vmem_cap)

    out2 = pl.pallas_call(
        kernel,
        out_shape=jax.ShapeDtypeStruct((R, out_dim), out_dtype),
        grid=grid,
        in_specs=in_specs,
        out_specs=out_specs,
        compiler_params=pltpu.CompilerParams(
            dimension_semantics=("parallel",),
            vmem_limit_bytes=vmem_limit),
    )(q2, k2, wqT, wkvT, ln1w, ln1b, ln2w, ln2b, w1T, b1, w2T, b2)

    return out2.reshape(B, T, out_dim)


def block_reference(query, keys, params, *, num_units, key_dim, h):
    # Pure-JAX reference (h == 1 path) for correctness checking.
    def ln(x, w, b, eps=1e-5):
        mu = x.mean(-1, keepdims=True)
        var = ((x - mu) ** 2).mean(-1, keepdims=True)
        return (x - mu) / jnp.sqrt(var + eps) * w + b

    Q = query @ params["Wq"].T
    K = keys @ params["Wk"].T
    V = keys @ params["Wv"].T
    s = jnp.einsum("btd,bsd->bts", Q, K) / math.sqrt(key_dim)
    a = jax.nn.softmax(s, axis=-1)
    attn = jnp.einsum("bts,bsd->btd", a, V)

    out = ln(attn, params["ln1_w"], params["ln1_b"])
    t = out @ params["W2"].T + params["b2"] + ln(out, params["ln2_w"], params["ln2_b"])
    t = t @ params["W1"].T + params["b1"]
    t = t + keys
    return t @ params["W1"].T + params["b1"]


def init_params(key, num_units, query_dim, key_dim, h):
    out_dim = num_units * h
    ks = jax.random.split(key, 7)
    s = 0.1
    return {
        "Wq": (jax.random.normal(ks[0], (num_units, query_dim), jnp.float32) * s),
        "Wk": (jax.random.normal(ks[1], (num_units, key_dim), jnp.float32) * s),
        "Wv": (jax.random.normal(ks[2], (num_units, key_dim), jnp.float32) * s),
        "ln1_w": jnp.ones((1, num_units), jnp.float32),
        "ln1_b": jnp.zeros((1, num_units), jnp.float32),
        "ln2_w": jnp.ones((1, num_units), jnp.float32),
        "ln2_b": jnp.zeros((1, num_units), jnp.float32),
        "W1": (jax.random.normal(ks[3], (out_dim, num_units), jnp.float32) * s),
        "b1": (jax.random.normal(ks[4], (1, out_dim), jnp.float32) * s),
        "W2": (jax.random.normal(ks[5], (out_dim, num_units), jnp.float32) * s),
        "b2": (jax.random.normal(ks[6], (1, out_dim), jnp.float32) * s),
    }


if __name__ == "__main__":
    # Small, self-consistent configuration: h must be 1 and
    # query_dim == key_dim == num_units for the forward to be valid.  We pick
    # num_units = 128 so the feature (lane) dimension is dense.
    B, T = 2, 8
    num_units = 128
    query_dim = key_dim = num_units
    h = 1

    root = jax.random.PRNGKey(0)
    kq, kk, kp = jax.random.split(root, 3)
    query = jax.random.normal(kq, (B, T, query_dim), jnp.float32)
    keys = jax.random.normal(kk, (B, T, key_dim), jnp.float32)
    params = init_params(kp, num_units, query_dim, key_dim, h)

    with jax.default_matmul_precision("float32"):
        ref = block_reference(query, keys, params,
                              num_units=num_units, key_dim=key_dim, h=h)

    # f32 MXU-operand path (exact divide in softmax normalization).
    out_f32 = jax.block_until_ready(
        block_forward(query, keys, params, num_units=num_units,
                      key_dim=key_dim, h=h, compute_dtype=jnp.float32))
    np.testing.assert_allclose(np.asarray(out_f32), np.asarray(ref),
                               rtol=2e-2, atol=2e-2)

    # bf16 MXU-operand path (headline throughput on v6e/v7x), bf16-appropriate
    # tolerance against the f32 reference.
    out_bf16 = jax.block_until_ready(
        block_forward(query, keys, params, num_units=num_units,
                      key_dim=key_dim, h=h, compute_dtype=jnp.bfloat16))
    np.testing.assert_allclose(np.asarray(out_bf16), np.asarray(ref),
                               rtol=5e-2, atol=5e-2)

    print("KERNEL_OK")
</pallas_src>

<mosaic_0001>
module attributes {stable_mosaic.version = 11 : i64} {
  func.func @block_kernel(%arg0: i32, %arg1: memref<16x128xf32, #tpu.memory_space<vmem>>, %arg2: memref<16x128xf32, #tpu.memory_space<vmem>>, %arg3: memref<128x128xf32, #tpu.memory_space<vmem>>, %arg4: memref<128x256xf32, #tpu.memory_space<vmem>>, %arg5: memref<1x128xf32, #tpu.memory_space<vmem>>, %arg6: memref<1x128xf32, #tpu.memory_space<vmem>>, %arg7: memref<1x128xf32, #tpu.memory_space<vmem>>, %arg8: memref<1x128xf32, #tpu.memory_space<vmem>>, %arg9: memref<128x128xf32, #tpu.memory_space<vmem>>, %arg10: memref<1x128xf32, #tpu.memory_space<vmem>>, %arg11: memref<128x128xf32, #tpu.memory_space<vmem>>, %arg12: memref<1x128xf32, #tpu.memory_space<vmem>>, %arg13: memref<16x128xf32, #tpu.memory_space<vmem>>) attributes {dimension_semantics = [#tpu.dimension_semantics<parallel>], iteration_bounds = array<i64: 1>, scalar_prefetch = 0 : i64, scratch_operands = 0 : i64, tpu.core_type = #tpu.core_type<tc>, window_params = [{transform_indices = @transform_0, window_bounds = array<i64: 16, 128>}, {transform_indices = @transform_1, window_bounds = array<i64: 16, 128>}, {pipeline_mode = #tpu.pipeline_mode<synchronous>, transform_indices = @transform_2, window_bounds = array<i64: 128, 128>}, {pipeline_mode = #tpu.pipeline_mode<synchronous>, transform_indices = @transform_3, window_bounds = array<i64: 128, 256>}, {pipeline_mode = #tpu.pipeline_mode<synchronous>, transform_indices = @transform_4, window_bounds = array<i64: 1, 128>}, {pipeline_mode = #tpu.pipeline_mode<synchronous>, transform_indices = @transform_5, window_bounds = array<i64: 1, 128>}, {pipeline_mode = #tpu.pipeline_mode<synchronous>, transform_indices = @transform_6, window_bounds = array<i64: 1, 128>}, {pipeline_mode = #tpu.pipeline_mode<synchronous>, transform_indices = @transform_7, window_bounds = array<i64: 1, 128>}, {pipeline_mode = #tpu.pipeline_mode<synchronous>, transform_indices = @transform_8, window_bounds = array<i64: 128, 128>}, {pipeline_mode = #tpu.pipeline_mode<synchronous>, transform_indices = @transform_9, window_bounds = array<i64: 1, 128>}, {pipeline_mode = #tpu.pipeline_mode<synchronous>, transform_indices = @transform_10, window_bounds = array<i64: 128, 128>}, {pipeline_mode = #tpu.pipeline_mode<synchronous>, transform_indices = @transform_11, window_bounds = array<i64: 1, 128>}, {transform_indices = @transform_12, window_bounds = array<i64: 16, 128>}]} {
    %c0 = arith.constant 0 : index
    %c0_0 = arith.constant 0 : index
    %0 = vector.load %arg1[%c0, %c0_0] : memref<16x128xf32, #tpu.memory_space<vmem>>, vector<16x128xf32>
    %c0_1 = arith.constant 0 : index
    %c0_2 = arith.constant 0 : index
    %1 = vector.load %arg2[%c0_1, %c0_2] : memref<16x128xf32, #tpu.memory_space<vmem>>, vector<16x128xf32>
    %c0_3 = arith.constant 0 : index
    %c0_4 = arith.constant 0 : index
    %2 = vector.load %arg3[%c0_3, %c0_4] : memref<128x128xf32, #tpu.memory_space<vmem>>, vector<128x128xf32>
    %cst = arith.constant dense<0.000000e+00> : vector<16x128xf32>
    %3 = tpu.matmul %0, %2, %cst {dimension_numbers = #tpu.dot_dimension_numbers<[1], [0], [0], [1], [0, 0, 1, 1], [], []>} : vector<16x128xf32>, vector<128x128xf32>, vector<16x128xf32> -> vector<16x128xf32>
    %c0_5 = arith.constant 0 : index
    %c0_6 = arith.constant 0 : index
    %4 = vector.load %arg4[%c0_5, %c0_6] : memref<128x256xf32, #tpu.memory_space<vmem>>, vector<128x256xf32>
    %cst_7 = arith.constant dense<0.000000e+00> : vector<16x256xf32>
    %5 = tpu.matmul %1, %4, %cst_7 {dimension_numbers = #tpu.dot_dimension_numbers<[1], [0], [0], [1], [0, 0, 1, 1], [], []>} : vector<16x128xf32>, vector<128x256xf32>, vector<16x256xf32> -> vector<16x256xf32>
    %6 = vector.extract_strided_slice %5 {offsets = [0, 0], sizes = [16, 128], strides = [1, 1]} : vector<16x256xf32> to vector<16x128xf32>
    %7 = vector.extract_strided_slice %5 {offsets = [0, 128], sizes = [16, 128], strides = [1, 1]} : vector<16x256xf32> to vector<16x128xf32>
    %8 = vector.shape_cast %3 : vector<16x128xf32> to vector<2x8x128xf32>
    %9 = vector.shape_cast %6 : vector<16x128xf32> to vector<2x8x128xf32>
    %10 = vector.shape_cast %7 : vector<16x128xf32> to vector<2x8x128xf32>
    "tpu.trace_start"() <{level = 10 : i32, message = "bqd,bkd->bqk"}> : () -> ()
    %cst_8 = arith.constant dense<0.000000e+00> : vector<2x8x8xf32>
    %11 = tpu.matmul %8, %9, %cst_8 {dimension_numbers = #tpu.dot_dimension_numbers<[2], [2], [1], [1], [0, 0, 0, 1, 1, 1], [0], [0]>} : vector<2x8x128xf32>, vector<2x8x128xf32>, vector<2x8x8xf32> -> vector<2x8x8xf32>
    "tpu.trace_stop"() : () -> ()
    %cst_9 = arith.constant dense<0xFF800000> : vector<2x8xf32>
    %12 = vector.multi_reduction <maximumf>, %11, %cst_9 [2] : vector<2x8x8xf32> to vector<2x8xf32>
    %13 = vector.shape_cast %12 : vector<2x8xf32> to vector<2x8x1xf32>
    %14 = vector.broadcast %13 : vector<2x8x1xf32> to vector<2x8x8xf32>
    %15 = arith.subf %11, %14 : vector<2x8x8xf32>
    %16 = math.exp %15 : vector<2x8x8xf32>
    %cst_10 = arith.constant dense<0.000000e+00> : vector<2x8xf32>
    %17 = vector.multi_reduction <add>, %16, %cst_10 [2] : vector<2x8x8xf32> to vector<2x8xf32>
    %18 = vector.shape_cast %17 : vector<2x8xf32> to vector<2x8x1xf32>
    %19 = vector.broadcast %18 : vector<2x8x1xf32> to vector<2x8x8xf32>
    %20 = arith.divf %16, %19 : vector<2x8x8xf32>
    "tpu.trace_start"() <{level = 10 : i32, message = "bqk,bkd->bqd"}> : () -> ()
    %cst_11 = arith.constant dense<0.000000e+00> : vector<2x8x128xf32>
    %21 = tpu.matmul %20, %10, %cst_11 {dimension_numbers = #tpu.dot_dimension_numbers<[2], [1], [1], [2], [0, 0, 0, 1, 1, 2], [0], [0]>} : vector<2x8x8xf32>, vector<2x8x128xf32>, vector<2x8x128xf32> -> vector<2x8x128xf32>
    "tpu.trace_stop"() : () -> ()
    %22 = vector.shape_cast %21 : vector<2x8x128xf32> to vector<16x128xf32>
    %c0_12 = arith.constant 0 : index
    %c0_13 = arith.constant 0 : index
    %23 = vector.load %arg5[%c0_12, %c0_13] : memref<1x128xf32, #tpu.memory_space<vmem>>, vector<1x128xf32>
    %c0_14 = arith.constant 0 : index
    %c0_15 = arith.constant 0 : index
    %24 = vector.load %arg6[%c0_14, %c0_15] : memref<1x128xf32, #tpu.memory_space<vmem>>, vector<1x128xf32>
    %c0_16 = arith.constant 0 : index
    %c0_17 = arith.constant 0 : index
    %25 = vector.load %arg7[%c0_16, %c0_17] : memref<1x128xf32, #tpu.memory_space<vmem>>, vector<1x128xf32>
    %c0_18 = arith.constant 0 : index
    %c0_19 = arith.constant 0 : index
    %26 = vector.load %arg8[%c0_18, %c0_19] : memref<1x128xf32, #tpu.memory_space<vmem>>, vector<1x128xf32>
    %c0_20 = arith.constant 0 : index
    %c0_21 = arith.constant 0 : index
    %27 = vector.load %arg10[%c0_20, %c0_21] : memref<1x128xf32, #tpu.memory_space<vmem>>, vector<1x128xf32>
    %c0_22 = arith.constant 0 : index
    %c0_23 = arith.constant 0 : index
    %28 = vector.load %arg12[%c0_22, %c0_23] : memref<1x128xf32, #tpu.memory_space<vmem>>, vector<1x128xf32>
    %cst_24 = arith.constant dense<0.000000e+00> : vector<16xf32>
    %29 = vector.multi_reduction <add>, %22, %cst_24 [1] : vector<16x128xf32> to vector<16xf32>
    %30 = vector.shape_cast %29 : vector<16xf32> to vector<16x1xf32>
    %cst_25 = arith.constant 1.280000e+02 : f32
    %31 = vector.broadcast %cst_25 : f32 to vector<16x1xf32>
    %32 = arith.divf %30, %31 : vector<16x1xf32>
    %33 = vector.broadcast %32 : vector<16x1xf32> to vector<16x128xf32>
    %34 = arith.subf %22, %33 : vector<16x128xf32>
    %35 = arith.mulf %34, %34 : vector<16x128xf32>
    %cst_26 = arith.constant dense<0.000000e+00> : vector<16xf32>
    %36 = vector.multi_reduction <add>, %35, %cst_26 [1] : vector<16x128xf32> to vector<16xf32>
    %37 = vector.shape_cast %36 : vector<16xf32> to vector<16x1xf32>
    %cst_27 = arith.constant 1.280000e+02 : f32
    %38 = vector.broadcast %cst_27 : f32 to vector<16x1xf32>
    %39 = arith.divf %37, %38 : vector<16x1xf32>
    %40 = vector.broadcast %32 : vector<16x1xf32> to vector<16x128xf32>
    %41 = arith.subf %22, %40 : vector<16x128xf32>
    %cst_28 = arith.constant 9.99999974E-6 : f32
    %42 = vector.broadcast %cst_28 : f32 to vector<16x1xf32>
    %43 = arith.addf %39, %42 : vector<16x1xf32>
    %44 = math.rsqrt %43 : vector<16x1xf32>
    %45 = vector.broadcast %44 : vector<16x1xf32> to vector<16x128xf32>
    %46 = arith.mulf %41, %45 : vector<16x128xf32>
    %47 = vector.broadcast %23 : vector<1x128xf32> to vector<16x128xf32>
    %48 = arith.mulf %46, %47 : vector<16x128xf32>
    %49 = vector.broadcast %24 : vector<1x128xf32> to vector<16x128xf32>
    %50 = arith.addf %48, %49 : vector<16x128xf32>
    %c0_29 = arith.constant 0 : index
    %c0_30 = arith.constant 0 : index
    %51 = vector.load %arg11[%c0_29, %c0_30] : memref<128x128xf32, #tpu.memory_space<vmem>>, vector<128x128xf32>
    %cst_31 = arith.constant dense<0.000000e+00> : vector<16x128xf32>
    %52 = tpu.matmul %50, %51, %cst_31 {dimension_numbers = #tpu.dot_dimension_numbers<[1], [0], [0], [1], [0, 0, 1, 1], [], []>} : vector<16x128xf32>, vector<128x128xf32>, vector<16x128xf32> -> vector<16x128xf32>
    %53 = vector.broadcast %28 : vector<1x128xf32> to vector<16x128xf32>
    %54 = arith.addf %52, %53 : vector<16x128xf32>
    %cst_32 = arith.constant dense<0.000000e+00> : vector<16xf32>
    %55 = vector.multi_reduction <add>, %50, %cst_32 [1] : vector<16x128xf32> to vector<16xf32>
    %56 = vector.shape_cast %55 : vector<16xf32> to vector<16x1xf32>
    %cst_33 = arith.constant 1.280000e+02 : f32
    %57 = vector.broadcast %cst_33 : f32 to vector<16x1xf32>
    %58 = arith.divf %56, %57 : vector<16x1xf32>
    %59 = vector.broadcast %58 : vector<16x1xf32> to vector<16x128xf32>
    %60 = arith.subf %50, %59 : vector<16x128xf32>
    %61 = arith.mulf %60, %60 : vector<16x128xf32>
    %cst_34 = arith.constant dense<0.000000e+00> : vector<16xf32>
    %62 = vector.multi_reduction <add>, %61, %cst_34 [1] : vector<16x128xf32> to vector<16xf32>
    %63 = vector.shape_cast %62 : vector<16xf32> to vector<16x1xf32>
    %cst_35 = arith.constant 1.280000e+02 : f32
    %64 = vector.broadcast %cst_35 : f32 to vector<16x1xf32>
    %65 = arith.divf %63, %64 : vector<16x1xf32>
    %66 = vector.broadcast %58 : vector<16x1xf32> to vector<16x128xf32>
    %67 = arith.subf %50, %66 : vector<16x128xf32>
    %cst_36 = arith.constant 9.99999974E-6 : f32
    %68 = vector.broadcast %cst_36 : f32 to vector<16x1xf32>
    %69 = arith.addf %65, %68 : vector<16x1xf32>
    %70 = math.rsqrt %69 : vector<16x1xf32>
    %71 = vector.broadcast %70 : vector<16x1xf32> to vector<16x128xf32>
    %72 = arith.mulf %67, %71 : vector<16x128xf32>
    %73 = vector.broadcast %25 : vector<1x128xf32> to vector<16x128xf32>
    %74 = arith.mulf %72, %73 : vector<16x128xf32>
    %75 = vector.broadcast %26 : vector<1x128xf32> to vector<16x128xf32>
    %76 = arith.addf %74, %75 : vector<16x128xf32>
    %77 = arith.addf %54, %76 : vector<16x128xf32>
    %c0_37 = arith.constant 0 : index
    %c0_38 = arith.constant 0 : index
    %78 = vector.load %arg9[%c0_37, %c0_38] : memref<128x128xf32, #tpu.memory_space<vmem>>, vector<128x128xf32>
    %cst_39 = arith.constant dense<0.000000e+00> : vector<16x128xf32>
    %79 = tpu.matmul %77, %78, %cst_39 {dimension_numbers = #tpu.dot_dimension_numbers<[1], [0], [0], [1], [0, 0, 1, 1], [], []>} : vector<16x128xf32>, vector<128x128xf32>, vector<16x128xf32> -> vector<16x128xf32>
    %80 = vector.broadcast %27 : vector<1x128xf32> to vector<16x128xf32>
    %81 = arith.addf %79, %80 : vector<16x128xf32>
    %82 = arith.addf %81, %1 : vector<16x128xf32>
    %c0_40 = arith.constant 0 : index
    %c0_41 = arith.constant 0 : index
    %83 = vector.load %arg9[%c0_40, %c0_41] : memref<128x128xf32, #tpu.memory_space<vmem>>, vector<128x128xf32>
    %cst_42 = arith.constant dense<0.000000e+00> : vector<16x128xf32>
    %84 = tpu.matmul %82, %83, %cst_42 {dimension_numbers = #tpu.dot_dimension_numbers<[1], [0], [0], [1], [0, 0, 1, 1], [], []>} : vector<16x128xf32>, vector<128x128xf32>, vector<16x128xf32> -> vector<16x128xf32>
    %85 = vector.broadcast %27 : vector<1x128xf32> to vector<16x128xf32>
    %86 = arith.addf %84, %85 : vector<16x128xf32>
    %c0_43 = arith.constant 0 : index
    %c0_44 = arith.constant 0 : index
    %87 = vector.load %arg13[%c0_43, %c0_44] : memref<16x128xf32, #tpu.memory_space<vmem>>, vector<16x128xf32>
    tpu.vector_store %arg13[%c0_43, %c0_44], %86 {strides = array<i32>} : memref<16x128xf32, #tpu.memory_space<vmem>>, vector<16x128xf32>,
    return
  }
  func.func @transform_0(%arg0: i32) -> (i32, i32) {
    %c0_i32 = arith.constant 0 : i32
    %c0_i32_0 = arith.constant 0 : i32
    return %arg0, %c0_i32 : i32, i32
  }
  func.func @transform_1(%arg0: i32) -> (i32, i32) {
    %c0_i32 = arith.constant 0 : i32
    %c0_i32_0 = arith.constant 0 : i32
    return %arg0, %c0_i32 : i32, i32
  }
  func.func @transform_2(%arg0: i32) -> (i32, i32) {
    %c0_i32 = arith.constant 0 : i32
    %c0_i32_0 = arith.constant 0 : i32
    %c0_i32_1 = arith.constant 0 : i32
    return %c0_i32, %c0_i32_0 : i32, i32
  }
  func.func @transform_3(%arg0: i32) -> (i32, i32) {
    %c0_i32 = arith.constant 0 : i32
    %c0_i32_0 = arith.constant 0 : i32
    %c0_i32_1 = arith.constant 0 : i32
    return %c0_i32, %c0_i32_0 : i32, i32
  }
  func.func @transform_4(%arg0: i32) -> (i32, i32) {
    %c0_i32 = arith.constant 0 : i32
    %c0_i32_0 = arith.constant 0 : i32
    %c0_i32_1 = arith.constant 0 : i32
    return %c0_i32, %c0_i32_0 : i32, i32
  }
  func.func @transform_5(%arg0: i32) -> (i32, i32) {
    %c0_i32 = arith.constant 0 : i32
    %c0_i32_0 = arith.constant 0 : i32
    %c0_i32_1 = arith.constant 0 : i32
    return %c0_i32, %c0_i32_0 : i32, i32
  }
  func.func @transform_6(%arg0: i32) -> (i32, i32) {
    %c0_i32 = arith.constant 0 : i32
    %c0_i32_0 = arith.constant 0 : i32
    %c0_i32_1 = arith.constant 0 : i32
    return %c0_i32, %c0_i32_0 : i32, i32
  }
  func.func @transform_7(%arg0: i32) -> (i32, i32) {
    %c0_i32 = arith.constant 0 : i32
    %c0_i32_0 = arith.constant 0 : i32
    %c0_i32_1 = arith.constant 0 : i32
    return %c0_i32, %c0_i32_0 : i32, i32
  }
  func.func @transform_8(%arg0: i32) -> (i32, i32) {
    %c0_i32 = arith.constant 0 : i32
    %c0_i32_0 = arith.constant 0 : i32
    %c0_i32_1 = arith.constant 0 : i32
    return %c0_i32, %c0_i32_0 : i32, i32
  }
  func.func @transform_9(%arg0: i32) -> (i32, i32) {
    %c0_i32 = arith.constant 0 : i32
    %c0_i32_0 = arith.constant 0 : i32
    %c0_i32_1 = arith.constant 0 : i32
    return %c0_i32, %c0_i32_0 : i32, i32
  }
  func.func @transform_10(%arg0: i32) -> (i32, i32) {
    %c0_i32 = arith.constant 0 : i32
    %c0_i32_0 = arith.constant 0 : i32
    %c0_i32_1 = arith.constant 0 : i32
    return %c0_i32, %c0_i32_0 : i32, i32
  }
  func.func @transform_11(%arg0: i32) -> (i32, i32) {
    %c0_i32 = arith.constant 0 : i32
    %c0_i32_0 = arith.constant 0 : i32
    %c0_i32_1 = arith.constant 0 : i32
    return %c0_i32, %c0_i32_0 : i32, i32
  }
  func.func @transform_12(%arg0: i32) -> (i32, i32) {
    %c0_i32 = arith.constant 0 : i32
    %c0_i32_0 = arith.constant 0 : i32
    return %arg0, %c0_i32 : i32, i32
  }
}

</mosaic_0001>

<llo_original>
// kernel: tpu_custom_call.1
$region0: #{tpu_custom_call.1}
  #allocation0 [shape = 'u32[]', space=smem, size = 0x4, offset = 0x4, fixed_abs, tag = 'smem constant byte address 0x4 - core index']
  #allocation1 [shape = 'u32[144,128]{1,0:T(1,128)}', space=vmem, size = 0x12000, scoped, tag = 'internal scratch']
  %s0 = inlined_call_operand.hbm [shape: f32[16,128], index: 0, kind: input, shape index: {}]
  %s1 = inlined_call_operand.hbm [shape: f32[16,128], index: 1, kind: input, shape index: {}]
  %s2 = inlined_call_operand.hbm [shape: f32[128,128], index: 2, kind: input, shape index: {}]
  %s3 = inlined_call_operand.hbm [shape: f32[128,256], index: 3, kind: input, shape index: {}]
  %s4 = inlined_call_operand.vmem [shape: f32[1,128], index: 4, kind: input, shape index: {}]
  %s5 = inlined_call_operand.vmem [shape: f32[1,128], index: 5, kind: input, shape index: {}]
  %s6 = inlined_call_operand.vmem [shape: f32[1,128], index: 6, kind: input, shape index: {}]
  %s7 = inlined_call_operand.vmem [shape: f32[1,128], index: 7, kind: input, shape index: {}]
  %s8 = inlined_call_operand.hbm [shape: f32[128,128], index: 8, kind: input, shape index: {}]
  %s9 = inlined_call_operand.vmem [shape: f32[1,128], index: 9, kind: input, shape index: {}]
  %s10 = inlined_call_operand.hbm [shape: f32[128,128], index: 10, kind: input, shape index: {}]
  %s11 = inlined_call_operand.vmem [shape: f32[1,128], index: 11, kind: input, shape index: {}]
  %s12 = inlined_call_operand.hbm [shape: f32[16,128], index: 12, kind: output, shape index: {}]
  %s13 = sld [smem:[#allocation0]]
  $region82: #{tpu_custom_call.1} parent=0
    _
  %s15 = ssub.s32 1, %s13
  %s16 = scalar_select 0, %s15, %s13
  $region1: #{tpu_custom_call.1} parent=0
    #allocation2 [shape = 'u8[8192]{0}', space=vmem, size = 0x2000, scoped, tag = 'input window, operand 0, single buffered']
    #allocation3 [shape = 's32[1]{0}', space=sflag, size = 0x4, scoped, tag = 'scoped memory for tpu_custom_call.1']
    #allocation4 [shape = 's32[1]{0}', space=sflag, size = 0x4, scoped, tag = 'scoped memory for tpu_custom_call.1']
    #allocation5 [shape = 'u8[8192]{0}', space=vmem, size = 0x2000, scoped, tag = 'input window, operand 1, single buffered']
    #allocation6 [shape = 's32[1]{0}', space=sflag, size = 0x4, scoped, tag = 'scoped memory for tpu_custom_call.1']
    #allocation7 [shape = 'u8[65536]{0}', space=vmem, size = 0x10000, scoped, tag = 'input window, operand 2, single buffered']
    #allocation8 [shape = 'u8[131072]{0}', space=vmem, size = 0x20000, scoped, tag = 'input window, operand 3, single buffered']
    #allocation9 [shape = 's32[1]{0}', space=sflag, size = 0x4, scoped, tag = 'scoped memory for tpu_custom_call.1']
    #allocation10 [shape = 'u8[65536]{0}', space=vmem, size = 0x10000, scoped, tag = 'input window, operand 8, single buffered']
    #allocation11 [shape = 'u8[65536]{0}', space=vmem, size = 0x10000, scoped, tag = 'input window, operand 10, single buffered']
    #allocation12 [shape = 's32[1]{0}', space=sflag, size = 0x4, scoped, tag = 'scoped memory for tpu_custom_call.1']
    #allocation13 [shape = 'u8[8192]{0}', space=vmem, size = 0x2000, scoped, tag = 'output window, operand 0, single buffered']
    %17 = vsyncpa [#allocation3], 0
    %18 = vsyncpa [#allocation6], 0
    %19 = vsyncpa [#allocation9], 0
    %20 = vsyncpa [#allocation12], 0
    %21 = vsyncpa [#allocation4], 0
    // Predicated region
    $region2: #{tpu_custom_call.1} parent=1 // pred_check
      _
    $region3: #{tpu_custom_call.1} parent=1 // pred_check_branch
      %23 = sbr.rel (0) target = $region5
    $region4: #{tpu_custom_call.1} parent=1 // pred_region
      %s25 = ssub.s32 256, 256
      %26 = vsyncadd [#allocation3], %s25
      %s27 = sshll.u32 [#allocation2], 4
      %s28 = int_to_ptr.vmem [resolvable:$true] %s27
      %33 = dma.hbm_to_vmem [thread:$0]  %s0, 256, %s28, [#allocation3], 128, 128, 8
    $region5: #{tpu_custom_call.1} parent=1 // pred_fallthru
      _
    // Predicated region
    $region6: #{tpu_custom_call.1} parent=1 // pred_check
      _
    $region7: #{tpu_custom_call.1} parent=1 // pred_check_branch
      %35 = sbr.rel (0) target = $region9
    $region8: #{tpu_custom_call.1} parent=1 // pred_region
      %s37 = ssub.s32 256, 256
      %38 = vsyncadd [#allocation6], %s37
      %s39 = sshll.u32 [#allocation5], 4
      %s40 = int_to_ptr.vmem [resolvable:$true] %s39
      %45 = dma.hbm_to_vmem [thread:$0]  %s1, 256, %s40, [#allocation6], 128, 128, 8
    $region9: #{tpu_custom_call.1} parent=1 // pred_fallthru
      _
    // Predicated region
    $region10: #{tpu_custom_call.1} parent=1 // pred_check
      _
    $region11: #{tpu_custom_call.1} parent=1 // pred_check_branch
      %47 = sbr.rel (0) target = $region13
    $region12: #{tpu_custom_call.1} parent=1 // pred_region
      %s49 = ssub.s32 2048, 2048
      %50 = vsyncadd [#allocation6], %s49
      %s51 = sshll.u32 [#allocation7], 4
      %s52 = int_to_ptr.vmem [resolvable:$true] %s51
      %57 = dma.hbm_to_vmem [thread:$0]  %s2, 2048, %s52, [#allocation6], 128, 128, 8
    $region13: #{tpu_custom_call.1} parent=1 // pred_fallthru
      _
    // Predicated region
    $region14: #{tpu_custom_call.1} parent=1 // pred_check
      _
    $region15: #{tpu_custom_call.1} parent=1 // pred_check_branch
      %59 = sbr.rel (0) target = $region17
    $region16: #{tpu_custom_call.1} parent=1 // pred_region
      %s61 = ssub.s32 4096, 4096
      %62 = vsyncadd [#allocation9], %s61
      %s63 = sshll.u32 [#allocation8], 4
      %s64 = int_to_ptr.vmem [resolvable:$true] %s63
      %69 = dma.hbm_to_vmem [thread:$0]  %s3, 4096, %s64, [#allocation9], 256, 256, 16
    $region17: #{tpu_custom_call.1} parent=1 // pred_fallthru
      _
    // Predicated region
    $region18: #{tpu_custom_call.1} parent=1 // pred_check
      _
    $region19: #{tpu_custom_call.1} parent=1 // pred_check_branch
      %71 = sbr.rel (0) target = $region21
    $region20: #{tpu_custom_call.1} parent=1 // pred_region
      _
    $region21: #{tpu_custom_call.1} parent=1 // pred_fallthru
      _
    // Predicated region
    $region22: #{tpu_custom_call.1} parent=1 // pred_check
      _
    $region23: #{tpu_custom_call.1} parent=1 // pred_check_branch
      %73 = sbr.rel (0) target = $region25
    $region24: #{tpu_custom_call.1} parent=1 // pred_region
      _
    $region25: #{tpu_custom_call.1} parent=1 // pred_fallthru
      _
    // Predicated region
    $region26: #{tpu_custom_call.1} parent=1 // pred_check
      _
    $region27: #{tpu_custom_call.1} parent=1 // pred_check_branch
      %75 = sbr.rel (0) target = $region29
    $region28: #{tpu_custom_call.1} parent=1 // pred_region
      _
    $region29: #{tpu_custom_call.1} parent=1 // pred_fallthru
      _
    // Predicated region
    $region30: #{tpu_custom_call.1} parent=1 // pred_check
      _
    $region31: #{tpu_custom_call.1} parent=1 // pred_check_branch
      %77 = sbr.rel (0) target = $region33
    $region32: #{tpu_custom_call.1} parent=1 // pred_region
      _
    $region33: #{tpu_custom_call.1} parent=1 // pred_fallthru
      _
    // Predicated region
    $region34: #{tpu_custom_call.1} parent=1 // pred_check
      _
    $region35: #{tpu_custom_call.1} parent=1 // pred_check_branch
      %79 = sbr.rel (0) target = $region37
    $region36: #{tpu_custom_call.1} parent=1 // pred_region
      %s81 = ssub.s32 2048, 2048
      %82 = vsyncadd [#allocation9], %s81
      %s83 = sshll.u32 [#allocation10], 4
      %s84 = int_to_ptr.vmem [resolvable:$true] %s83
      %89 = dma.hbm_to_vmem [thread:$0]  %s8, 2048, %s84, [#allocation9], 128, 128, 8
    $region37: #{tpu_custom_call.1} parent=1 // pred_fallthru
      _
    // Predicated region
    $region38: #{tpu_custom_call.1} parent=1 // pred_check
      _
    $region39: #{tpu_custom_call.1} parent=1 // pred_check_branch
      %91 = sbr.rel (0) target = $region41
    $region40: #{tpu_custom_call.1} parent=1 // pred_region
      _
    $region41: #{tpu_custom_call.1} parent=1 // pred_fallthru
      _
    // Predicated region
    $region42: #{tpu_custom_call.1} parent=1 // pred_check
      _
    $region43: #{tpu_custom_call.1} parent=1 // pred_check_branch
      %93 = sbr.rel (0) target = $region45
    $region44: #{tpu_custom_call.1} parent=1 // pred_region
      %s95 = ssub.s32 2048, 2048
      %96 = vsyncadd [#allocation12], %s95
      %s97 = sshll.u32 [#allocation11], 4
      %s98 = int_to_ptr.vmem [resolvable:$true] %s97
      %103 = dma.hbm_to_vmem [thread:$0]  %s10, 2048, %s98, [#allocation12], 128, 128, 8
    $region45: #{tpu_custom_call.1} parent=1 // pred_fallthru
      _
    // Predicated region
    $region46: #{tpu_custom_call.1} parent=1 // pred_check
      _
    $region47: #{tpu_custom_call.1} parent=1 // pred_check_branch
      %105 = sbr.rel (0) target = $region49
    $region48: #{tpu_custom_call.1} parent=1 // pred_region
      _
    $region49: #{tpu_custom_call.1} parent=1 // pred_fallthru
      _
    // Predicated region
    $region50: #{tpu_custom_call.1} parent=1 // pred_check
      _
    $region51: #{tpu_custom_call.1} parent=1 // pred_check_branch
      %107 = sbr.rel (0) target = $region53
    $region52: #{tpu_custom_call.1} parent=1 // pred_region
      %108 = dma.done [#allocation3], 256
    $region53: #{tpu_custom_call.1} parent=1 // pred_fallthru
      _
    // Predicated region
    $region54: #{tpu_custom_call.1} parent=1 // pred_check
      _
    $region55: #{tpu_custom_call.1} parent=1 // pred_check_branch
      %110 = sbr.rel (0) target = $region57
    $region56: #{tpu_custom_call.1} parent=1 // pred_region
      %111 = dma.done [#allocation6], 256
    $region57: #{tpu_custom_call.1} parent=1 // pred_fallthru
      _
    // Predicated region
    $region58: #{tpu_custom_call.1} parent=1 // pred_check
      _
    $region59: #{tpu_custom_call.1} parent=1 // pred_check_branch
      %113 = sbr.rel (0) target = $region61
    $region60: #{tpu_custom_call.1} parent=1 // pred_region
      %114 = dma.done [#allocation6], 2048
    $region61: #{tpu_custom_call.1} parent=1 // pred_fallthru
      _
    // Predicated region
    $region62: #{tpu_custom_call.1} parent=1 // pred_check
      _
    $region63: #{tpu_custom_call.1} parent=1 // pred_check_branch
      %116 = sbr.rel (0) target = $region65
    $region64: #{tpu_custom_call.1} parent=1 // pred_region
      %117 = dma.done [#allocation9], 4096
    $region65: #{tpu_custom_call.1} parent=1 // pred_fallthru
      _
    // Predicated region
    $region66: #{tpu_custom_call.1} parent=1 // pred_check
      _
    $region67: #{tpu_custom_call.1} parent=1 // pred_check_branch
      %119 = sbr.rel (0) target = $region69
    $region68: #{tpu_custom_call.1} parent=1 // pred_region
      %120 = dma.done [#allocation9], 2048
    $region69: #{tpu_custom_call.1} parent=1 // pred_fallthru
      _
    // Predicated region
    $region70: #{tpu_custom_call.1} parent=1 // pred_check
      _
    $region71: #{tpu_custom_call.1} parent=1 // pred_check_branch
      %122 = sbr.rel (0) target = $region73
    $region72: #{tpu_custom_call.1} parent=1 // pred_region
      %123 = dma.done [#allocation12], 2048
    $region73: #{tpu_custom_call.1} parent=1 // pred_fallthru
      _
    %v124 = vld [vmem:[#allocation2] sm:$0xff]
    %v125 = vld [vmem:[#allocation2 + $0x8] sm:$0xff]
    %v126 = vld [vmem:[#allocation5] sm:$0xff]
    %v127 = vld [vmem:[#allocation5 + $0x8] sm:$0xff]
    %v128 = vld [vmem:[#allocation7] sm:$0xff]
    %v129 = vld [vmem:[#allocation7 + $0x8] sm:$0xff]
    %v130 = vld [vmem:[#allocation7 + $0x10] sm:$0xff]
    %v131 = vld [vmem:[#allocation7 + $0x18] sm:$0xff]
    %v132 = vld [vmem:[#allocation7 + $0x20] sm:$0xff]
    %v133 = vld [vmem:[#allocation7 + $0x28] sm:$0xff]
    %v134 = vld [vmem:[#allocation7 + $0x30] sm:$0xff]
    %v135 = vld [vmem:[#allocation7 + $0x38] sm:$0xff]
    %v136 = vld [vmem:[#allocation7 + $0x40] sm:$0xff]
    %v137 = vld [vmem:[#allocation7 + $0x48] sm:$0xff]
    %v138 = vld [vmem:[#allocation7 + $0x50] sm:$0xff]
    %v139 = vld [vmem:[#allocation7 + $0x58] sm:$0xff]
    %v140 = vld [vmem:[#allocation7 + $0x60] sm:$0xff]
    %v141 = vld [vmem:[#allocation7 + $0x68] sm:$0xff]
    %v142 = vld [vmem:[#allocation7 + $0x70] sm:$0xff]
    %v143 = vld [vmem:[#allocation7 + $0x78] sm:$0xff]
    %144 = vmatprep.subr.mxu0 0.0
    %145 = vmatpush1.msra.mxu0 %v128
    %146 = vmatprep.subr.mxu0 0.0
    %147 = vmatpush1.msra.mxu0 %v129
    %148 = vmatprep.subr.mxu0 0.0
    %149 = vmatpush1.msra.mxu0 %v130
    %150 = vmatprep.subr.mxu0 0.0
    %151 = vmatpush1.msra.mxu0 %v131
    %152 = vmatprep.subr.mxu0 0.0
    %153 = vmatpush1.msra.mxu0 %v132
    %154 = vmatprep.subr.mxu0 0.0
    %155 = vmatpush1.msra.mxu0 %v133
    %156 = vmatprep.subr.mxu0 0.0
    %157 = vmatpush1.msra.mxu0 %v134
    %158 = vmatprep.subr.mxu0 0.0
    %159 = vmatpush1.msra.mxu0 %v135
    %160 = vmatprep.subr.mxu0 0.0
    %161 = vmatpush1.msra.mxu0 %v136
    %162 = vmatprep.subr.mxu0 0.0
    %163 = vmatpush1.msra.mxu0 %v137
    %164 = vmatprep.subr.mxu0 0.0
    %165 = vmatpush1.msra.mxu0 %v138
    %166 = vmatprep.subr.mxu0 0.0
    %167 = vmatpush1.msra.mxu0 %v139
    %168 = vmatprep.subr.mxu0 0.0
    %169 = vmatpush1.msra.mxu0 %v140
    %170 = vmatprep.subr.mxu0 0.0
    %171 = vmatpush1.msra.mxu0 %v141
    %172 = vmatprep.subr.mxu0 0.0
    %173 = vmatpush1.msra.mxu0 %v142
    %174 = vmatprep.subr.mxu0 0.0
    %175 = vmatpush1.msra.mxu0 %v143
    %176 = vmatprep.subr.mxu0 0.0
    %177 = vmatpush1.msra.mxu0 0.0
    %178 = vmatprep.subr.mxu0 0.0
    %179 = vmatpush1.msra.mxu0 0.0
    %180 = vmatprep.subr.mxu0 0.0
    %181 = vmatpush1.msra.mxu0 0.0
    %182 = vmatprep.subr.mxu0 0.0
    %183 = vmatpush1.msra.mxu0 0.0
    %184 = vmatprep.subr.mxu0 0.0
    %185 = vmatpush1.msra.mxu0 0.0
    %186 = vmatprep.subr.mxu0 0.0
    %187 = vmatpush1.msra.mxu0 0.0
    %188 = vmatprep.subr.mxu0 0.0
    %189 = vmatpush1.msra.mxu0 0.0
    %190 = vmatprep.subr.mxu0 0.0
    %191 = vmatpush1.msra.mxu0 0.0
    %192 = vmatprep.subr.mxu0 0.0
    %193 = vmatpush1.msra.mxu0 0.0
    %194 = vmatprep.subr.mxu0 0.0
    %195 = vmatpush1.msra.mxu0 0.0
    %196 = vmatprep.subr.mxu0 0.0
    %197 = vmatpush1.msra.mxu0 0.0
    %198 = vmatprep.subr.mxu0 0.0
    %199 = vmatpush1.msra.mxu0 0.0
    %200 = vmatprep.subr.mxu0 0.0
    %201 = vmatpush1.msra.mxu0 0.0
    %202 = vmatprep.subr.mxu0 0.0
    %203 = vmatpush1.msra.mxu0 0.0
    %204 = vmatprep.subr.mxu0 0.0
    %205 = vmatpush1.msra.mxu0 0.0
    %206 = vmatprep.subr.mxu0 0.0
    %207 = vmatpush1.msra.mxu0 0.0
    %208 = vmatprep.mubr.f32.mxu0 0.0
    %209 = vmatmul.mubr.f32.gmra.mrb[0].mxu0 %v124
    %v210 = vpop.f32.mrb[0].mxu0
    %v211 = vadd.f32 0.0, %v210
    %v212 = vpop.f32.mrb[0].mxu0
    %213 = vmatprep.mubr.f32.mxu0 0.0
    %214 = vmatmul.mubr.f32.gmra.mrb[0].mxu0 %v125
    %v215 = vpop.f32.mrb[0].mxu0
    %v216 = vadd.f32 0.0, %v215
    %v217 = vpop.f32.mrb[0].mxu0
    %218 = vdwg.mxu0
    %v219 = vld [vmem:[#allocation8] sm:$0xff]
    %v220 = vld [vmem:[#allocation8 + $0x8] sm:$0xff]
    %v221 = vld [vmem:[#allocation8 + $0x10] sm:$0xff]
    %v222 = vld [vmem:[#allocation8 + $0x18] sm:$0xff]
    %v223 = vld [vmem:[#allocation8 + $0x20] sm:$0xff]
    %v224 = vld [vmem:[#allocation8 + $0x28] sm:$0xff]
    %v225 = vld [vmem:[#allocation8 + $0x30] sm:$0xff]
    %v226 = vld [vmem:[#allocation8 + $0x38] sm:$0xff]
    %v227 = vld [vmem:[#allocation8 + $0x40] sm:$0xff]
    %v228 = vld [vmem:[#allocation8 + $0x48] sm:$0xff]
    %v229 = vld [vmem:[#allocation8 + $0x50] sm:$0xff]
    %v230 = vld [vmem:[#allocation8 + $0x58] sm:$0xff]
    %v231 = vld [vmem:[#allocation8 + $0x60] sm:$0xff]
    %v232 = vld [vmem:[#allocation8 + $0x68] sm:$0xff]
    %v233 = vld [vmem:[#allocation8 + $0x70] sm:$0xff]
    %v234 = vld [vmem:[#allocation8 + $0x78] sm:$0xff]
    %v235 = vld [vmem:[#allocation8 + $0x80] sm:$0xff]
    %v236 = vld [vmem:[#allocation8 + $0x88] sm:$0xff]
    %v237 = vld [vmem:[#allocation8 + $0x90] sm:$0xff]
    %v238 = vld [vmem:[#allocation8 + $0x98] sm:$0xff]
    %v239 = vld [vmem:[#allocation8 + $0xa0] sm:$0xff]
    %v240 = vld [vmem:[#allocation8 + $0xa8] sm:$0xff]
    %v241 = vld [vmem:[#allocation8 + $0xb0] sm:$0xff]
    %v242 = vld [vmem:[#allocation8 + $0xb8] sm:$0xff]
    %v243 = vld [vmem:[#allocation8 + $0xc0] sm:$0xff]
    %v244 = vld [vmem:[#allocation8 + $0xc8] sm:$0xff]
    %v245 = vld [vmem:[#allocation8 + $0xd0] sm:$0xff]
    %v246 = vld [vmem:[#allocation8 + $0xd8] sm:$0xff]
    %v247 = vld [vmem:[#allocation8 + $0xe0] sm:$0xff]
    %v248 = vld [vmem:[#allocation8 + $0xe8] sm:$0xff]
    %v249 = vld [vmem:[#allocation8 + $0xf0] sm:$0xff]
    %v250 = vld [vmem:[#allocation8 + $0xf8] sm:$0xff]
    %251 = vmatprep.subr.mxu0 %v220
    %252 = vmatpush1.msra.mxu0 %v219
    %253 = vmatprep.subr.mxu0 %v222
    %254 = vmatpush1.msra.mxu0 %v221
    %255 = vmatprep.subr.mxu0 %v224
    %256 = vmatpush1.msra.mxu0 %v223
    %257 = vmatprep.subr.mxu0 %v226
    %258 = vmatpush1.msra.mxu0 %v225
    %259 = vmatprep.subr.mxu0 %v228
    %260 = vmatpush1.msra.mxu0 %v227
    %261 = vmatprep.subr.mxu0 %v230
    %262 = vmatpush1.msra.mxu0 %v229
    %263 = vmatprep.subr.mxu0 %v232
    %264 = vmatpush1.msra.mxu0 %v231
    %265 = vmatprep.subr.mxu0 %v234
    %266 = vmatpush1.msra.mxu0 %v233
    %267 = vmatprep.subr.mxu0 %v236
    %268 = vmatpush1.msra.mxu0 %v235
    %269 = vmatprep.subr.mxu0 %v238
    %270 = vmatpush1.msra.mxu0 %v237
    %271 = vmatprep.subr.mxu0 %v240
    %272 = vmatpush1.msra.mxu0 %v239
    %273 = vmatprep.subr.mxu0 %v242
    %274 = vmatpush1.msra.mxu0 %v241
    %275 = vmatprep.subr.mxu0 %v244
    %276 = vmatpush1.msra.mxu0 %v243
    %277 = vmatprep.subr.mxu0 %v246
    %278 = vmatpush1.msra.mxu0 %v245
    %279 = vmatprep.subr.mxu0 %v248
    %280 = vmatpush1.msra.mxu0 %v247
    %281 = vmatprep.subr.mxu0 %v250
    %282 = vmatpush1.msra.mxu0 %v249
    %283 = vmatprep.subr.mxu0 0.0
    %284 = vmatpush1.msra.mxu0 0.0
    %285 = vmatprep.subr.mxu0 0.0
    %286 = vmatpush1.msra.mxu0 0.0
    %287 = vmatprep.subr.mxu0 0.0
    %288 = vmatpush1.msra.mxu0 0.0
    %289 = vmatprep.subr.mxu0 0.0
    %290 = vmatpush1.msra.mxu0 0.0
    %291 = vmatprep.subr.mxu0 0.0
    %292 = vmatpush1.msra.mxu0 0.0
    %293 = vmatprep.subr.mxu0 0.0
    %294 = vmatpush1.msra.mxu0 0.0
    %295 = vmatprep.subr.mxu0 0.0
    %296 = vmatpush1.msra.mxu0 0.0
    %297 = vmatprep.subr.mxu0 0.0
    %298 = vmatpush1.msra.mxu0 0.0
    %299 = vmatprep.subr.mxu0 0.0
    %300 = vmatpush1.msra.mxu0 0.0
    %301 = vmatprep.subr.mxu0 0.0
    %302 = vmatpush1.msra.mxu0 0.0
    %303 = vmatprep.subr.mxu0 0.0
    %304 = vmatpush1.msra.mxu0 0.0
    %305 = vmatprep.subr.mxu0 0.0
    %306 = vmatpush1.msra.mxu0 0.0
    %307 = vmatprep.subr.mxu0 0.0
    %308 = vmatpush1.msra.mxu0 0.0
    %309 = vmatprep.subr.mxu0 0.0
    %310 = vmatpush1.msra.mxu0 0.0
    %311 = vmatprep.subr.mxu0 0.0
    %312 = vmatpush1.msra.mxu0 0.0
    %313 = vmatprep.subr.mxu0 0.0
    %314 = vmatpush1.msra.mxu0 0.0
    %315 = vmatprep.mubr.f32.mxu0 0.0
    %316 = vmatmul.mubr.f32.gmra.mrb[0].mxu0 %v126
    %v317 = vpop.f32.mrb[0].mxu0
    %v318 = vadd.f32 0.0, %v317
    %v319 = vpop.f32.mrb[0].mxu0
    %v320 = vadd.f32 0.0, %v319
    %321 = vmatprep.mubr.f32.mxu0 0.0
    %322 = vmatmul.mubr.f32.gmra.mrb[0].mxu0 %v127
    %v323 = vpop.f32.mrb[0].mxu0
    %v324 = vadd.f32 0.0, %v323
    %v325 = vpop.f32.mrb[0].mxu0
    %v326 = vadd.f32 0.0, %v325
    %327 = vdwg.mxu0
    %328 = vmatprep.subr.mxu0 0.0
    %329 = vmatpush1.xpose.msra.mxu0 %v318
    %330 = vmatprep.subr.mxu0 0.0
    %331 = vmatpush1.xpose.msra.mxu0 0.0
    %332 = vmatprep.subr.mxu0 0.0
    %333 = vmatpush1.xpose.msra.mxu0 0.0
    %334 = vmatprep.subr.mxu0 0.0
    %335 = vmatpush1.xpose.msra.mxu0 0.0
    %336 = vmatprep.subr.mxu0 0.0
    %337 = vmatpush1.xpose.msra.mxu0 0.0
    %338 = vmatprep.subr.mxu0 0.0
    %339 = vmatpush1.xpose.msra.mxu0 0.0
    %340 = vmatprep.subr.mxu0 0.0
    %341 = vmatpush1.xpose.msra.mxu0 0.0
    %342 = vmatprep.subr.mxu0 0.0
    %343 = vmatpush1.xpose.msra.mxu0 0.0
    %344 = vmatprep.subr.mxu0 0.0
    %345 = vmatpush1.xpose.msra.mxu0 0.0
    %346 = vmatprep.subr.mxu0 0.0
    %347 = vmatpush1.xpose.msra.mxu0 0.0
    %348 = vmatprep.subr.mxu0 0.0
    %349 = vmatpush1.xpose.msra.mxu0 0.0
    %350 = vmatprep.subr.mxu0 0.0
    %351 = vmatpush1.xpose.msra.mxu0 0.0
    %352 = vmatprep.subr.mxu0 0.0
    %353 = vmatpush1.xpose.msra.mxu0 0.0
    %354 = vmatprep.subr.mxu0 0.0
    %355 = vmatpush1.xpose.msra.mxu0 0.0
    %356 = vmatprep.subr.mxu0 0.0
    %357 = vmatpush1.xpose.msra.mxu0 0.0
    %358 = vmatprep.subr.mxu0 0.0
    %359 = vmatpush1.xpose.msra.mxu0 0.0
    %360 = vmatprep.subr.mxu0 0.0
    %361 = vmatpush1.xpose.msra.mxu0 0.0
    %362 = vmatprep.subr.mxu0 0.0
    %363 = vmatpush1.xpose.msra.mxu0 0.0
    %364 = vmatprep.subr.mxu0 0.0
    %365 = vmatpush1.xpose.msra.mxu0 0.0
    %366 = vmatprep.subr.mxu0 0.0
    %367 = vmatpush1.xpose.msra.mxu0 0.0
    %368 = vmatprep.subr.mxu0 0.0
    %369 = vmatpush1.xpose.msra.mxu0 0.0
    %370 = vmatprep.subr.mxu0 0.0
    %371 = vmatpush1.xpose.msra.mxu0 0.0
    %372 = vmatprep.subr.mxu0 0.0
    %373 = vmatpush1.xpose.msra.mxu0 0.0
    %374 = vmatprep.subr.mxu0 0.0
    %375 = vmatpush1.xpose.msra.mxu0 0.0
    %376 = vmatprep.subr.mxu0 0.0
    %377 = vmatpush1.xpose.msra.mxu0 0.0
    %378 = vmatprep.subr.mxu0 0.0
    %379 = vmatpush1.xpose.msra.mxu0 0.0
    %380 = vmatprep.subr.mxu0 0.0
    %381 = vmatpush1.xpose.msra.mxu0 0.0
    %382 = vmatprep.subr.mxu0 0.0
    %383 = vmatpush1.xpose.msra.mxu0 0.0
    %384 = vmatprep.subr.mxu0 0.0
    %385 = vmatpush1.xpose.msra.mxu0 0.0
    %386 = vmatprep.subr.mxu0 0.0
    %387 = vmatpush1.xpose.msra.mxu0 0.0
    %388 = vmatprep.subr.mxu0 0.0
    %389 = vmatpush1.xpose.msra.mxu0 0.0
    %390 = vmatprep.subr.mxu0 0.0
    %391 = vmatpush1.xpose.msra.mxu0 0.0
    %392 = vmatprep.mubr.f32.mxu0 0.0
    %393 = vmatmul.mubr.f32.gmra.mrb[0].mxu0 %v211
    %v394 = vpop.f32.mrb[0].mxu0
    %v395 = vadd.f32 0.0, %v394
    %v396 = vpop.f32.mrb[0].mxu0
    %397 = vdwg.mxu0
    %398 = vmatprep.subr.mxu0 0.0
    %399 = vmatpush1.xpose.msra.mxu0 %v324
    %400 = vmatprep.subr.mxu0 0.0
    %401 = vmatpush1.xpose.msra.mxu0 0.0
    %402 = vmatprep.subr.mxu0 0.0
    %403 = vmatpush1.xpose.msra.mxu0 0.0
    %404 = vmatprep.subr.mxu0 0.0
    %405 = vmatpush1.xpose.msra.mxu0 0.0
    %406 = vmatprep.subr.mxu0 0.0
    %407 = vmatpush1.xpose.msra.mxu0 0.0
    %408 = vmatprep.subr.mxu0 0.0
    %409 = vmatpush1.xpose.msra.mxu0 0.0
    %410 = vmatprep.subr.mxu0 0.0
    %411 = vmatpush1.xpose.msra.mxu0 0.0
    %412 = vmatprep.subr.mxu0 0.0
    %413 = vmatpush1.xpose.msra.mxu0 0.0
    %414 = vmatprep.subr.mxu0 0.0
    %415 = vmatpush1.xpose.msra.mxu0 0.0
    %416 = vmatprep.subr.mxu0 0.0
    %417 = vmatpush1.xpose.msra.mxu0 0.0
    %418 = vmatprep.subr.mxu0 0.0
    %419 = vmatpush1.xpose.msra.mxu0 0.0
    %420 = vmatprep.subr.mxu0 0.0
    %421 = vmatpush1.xpose.msra.mxu0 0.0
    %422 = vmatprep.subr.mxu0 0.0
    %423 = vmatpush1.xpose.msra.mxu0 0.0
    %424 = vmatprep.subr.mxu0 0.0
    %425 = vmatpush1.xpose.msra.mxu0 0.0
    %426 = vmatprep.subr.mxu0 0.0
    %427 = vmatpush1.xpose.msra.mxu0 0.0
    %428 = vmatprep.subr.mxu0 0.0
    %429 = vmatpush1.xpose.msra.mxu0 0.0
    %430 = vmatprep.subr.mxu0 0.0
    %431 = vmatpush1.xpose.msra.mxu0 0.0
    %432 = vmatprep.subr.mxu0 0.0
    %433 = vmatpush1.xpose.msra.mxu0 0.0
    %434 = vmatprep.subr.mxu0 0.0
    %435 = vmatpush1.xpose.msra.mxu0 0.0
    %436 = vmatprep.subr.mxu0 0.0
    %437 = vmatpush1.xpose.msra.mxu0 0.0
    %438 = vmatprep.subr.mxu0 0.0
    %439 = vmatpush1.xpose.msra.mxu0 0.0
    %440 = vmatprep.subr.mxu0 0.0
    %441 = vmatpush1.xpose.msra.mxu0 0.0
    %442 = vmatprep.subr.mxu0 0.0
    %443 = vmatpush1.xpose.msra.mxu0 0.0
    %444 = vmatprep.subr.mxu0 0.0
    %445 = vmatpush1.xpose.msra.mxu0 0.0
    %446 = vmatprep.subr.mxu0 0.0
    %447 = vmatpush1.xpose.msra.mxu0 0.0
    %448 = vmatprep.subr.mxu0 0.0
    %449 = vmatpush1.xpose.msra.mxu0 0.0
    %450 = vmatprep.subr.mxu0 0.0
    %451 = vmatpush1.xpose.msra.mxu0 0.0
    %452 = vmatprep.subr.mxu0 0.0
    %453 = vmatpush1.xpose.msra.mxu0 0.0
    %454 = vmatprep.subr.mxu0 0.0
    %455 = vmatpush1.xpose.msra.mxu0 0.0
    %456 = vmatprep.subr.mxu0 0.0
    %457 = vmatpush1.xpose.msra.mxu0 0.0
    %458 = vmatprep.subr.mxu0 0.0
    %459 = vmatpush1.xpose.msra.mxu0 0.0
    %460 = vmatprep.subr.mxu0 0.0
    %461 = vmatpush1.xpose.msra.mxu0 0.0
    %462 = vmatprep.mubr.f32.mxu0 0.0
    %463 = vmatmul.mubr.f32.gmra.mrb[0].mxu0 %v216
    %v464 = vpop.f32.mrb[0].mxu0
    %v465 = vadd.f32 0.0, %v464
    %v466 = vpop.f32.mrb[0].mxu0
    %467 = vdwg.mxu0
    %vm468 = vcmask 64512
    %v469 = vsel %vm468, %v395, -inf
    %470 = vmax.xlane.f32.xlu0 %v469
    %v471 = vpop.xlane.xlu0 %470
    %v472 = vsel %vm468, %v465, -inf
    %473 = vmax.xlane.f32.xlu0 %v472
    %v474 = vpop.xlane.xlu0 %473
    %v475 = vsub.f32 %v395, %v471
    %v476 = vsub.f32 %v465, %v474
    %v477 = vmul.f32 %v475, 1.442695
    %v478 = vpow.pop %v477
    %v479 = vmul.f32 %v476, 1.442695
    %v480 = vpow.pop %v479
    %v481 = vsel %vm468, %v478, 0.0
    %482 = vadd.xlane.f32.xlu0 %v481
    %v483 = vpop.xlane.xlu0 %482
    %v484 = vsel %vm468, %v480, 0.0
    %485 = vadd.xlane.f32.xlu0 %v484
    %v486 = vpop.xlane.xlu0 %485
    %v487 = vrcp.pop %v483
    %v488 = vmul.f32 %v478, %v487
    %v489 = vrcp.pop %v486
    %v490 = vmul.f32 %v480, %v489
    %v492 = vsel %vm468, %v488, 0
    %494 = vmatprep.subr.mxu0 0.0
    %495 = vmatpush1.msra.mxu0 %v320
    %496 = vmatprep.subr.mxu0 0.0
    %497 = vmatpush1.msra.mxu0 0.0
    %498 = vmatprep.subr.mxu0 0.0
    %499 = vmatpush1.msra.mxu0 0.0
    %500 = vmatprep.subr.mxu0 0.0
    %501 = vmatpush1.msra.mxu0 0.0
    %502 = vmatprep.subr.mxu0 0.0
    %503 = vmatpush1.msra.mxu0 0.0
    %504 = vmatprep.subr.mxu0 0.0
    %505 = vmatpush1.msra.mxu0 0.0
    %506 = vmatprep.subr.mxu0 0.0
    %507 = vmatpush1.msra.mxu0 0.0
    %508 = vmatprep.subr.mxu0 0.0
    %509 = vmatpush1.msra.mxu0 0.0
    %510 = vmatprep.subr.mxu0 0.0
    %511 = vmatpush1.msra.mxu0 0.0
    %512 = vmatprep.subr.mxu0 0.0
    %513 = vmatpush1.msra.mxu0 0.0
    %514 = vmatprep.subr.mxu0 0.0
    %515 = vmatpush1.msra.mxu0 0.0
    %516 = vmatprep.subr.mxu0 0.0
    %517 = vmatpush1.msra.mxu0 0.0
    %518 = vmatprep.subr.mxu0 0.0
    %519 = vmatpush1.msra.mxu0 0.0
    %520 = vmatprep.subr.mxu0 0.0
    %521 = vmatpush1.msra.mxu0 0.0
    %522 = vmatprep.subr.mxu0 0.0
    %523 = vmatpush1.msra.mxu0 0.0
    %524 = vmatprep.subr.mxu0 0.0
    %525 = vmatpush1.msra.mxu0 0.0
    %526 = vmatprep.subr.mxu0 0.0
    %527 = vmatpush1.msra.mxu0 0.0
    %528 = vmatprep.subr.mxu0 0.0
    %529 = vmatpush1.msra.mxu0 0.0
    %530 = vmatprep.subr.mxu0 0.0
    %531 = vmatpush1.msra.mxu0 0.0
    %532 = vmatprep.subr.mxu0 0.0
    %533 = vmatpush1.msra.mxu0 0.0
    %534 = vmatprep.subr.mxu0 0.0
    %535 = vmatpush1.msra.mxu0 0.0
    %536 = vmatprep.subr.mxu0 0.0
    %537 = vmatpush1.msra.mxu0 0.0
    %538 = vmatprep.subr.mxu0 0.0
    %539 = vmatpush1.msra.mxu0 0.0
    %540 = vmatprep.subr.mxu0 0.0
    %541 = vmatpush1.msra.mxu0 0.0
    %542 = vmatprep.subr.mxu0 0.0
    %543 = vmatpush1.msra.mxu0 0.0
    %544 = vmatprep.subr.mxu0 0.0
    %545 = vmatpush1.msra.mxu0 0.0
    %546 = vmatprep.subr.mxu0 0.0
    %547 = vmatpush1.msra.mxu0 0.0
    %548 = vmatprep.subr.mxu0 0.0
    %549 = vmatpush1.msra.mxu0 0.0
    %550 = vmatprep.subr.mxu0 0.0
    %551 = vmatpush1.msra.mxu0 0.0
    %552 = vmatprep.subr.mxu0 0.0
    %553 = vmatpush1.msra.mxu0 0.0
    %554 = vmatprep.subr.mxu0 0.0
    %555 = vmatpush1.msra.mxu0 0.0
    %556 = vmatprep.subr.mxu0 0.0
    %557 = vmatpush1.msra.mxu0 0.0
    %558 = vmatprep.mubr.f32.mxu0 0.0
    %559 = vmatmul.mubr.f32.gmra.mrb[0].mxu0 %v492
    %v560 = vpop.f32.mrb[0].mxu0
    %v561 = vadd.f32 0.0, %v560
    %v562 = vpop.f32.mrb[0].mxu0
    %563 = vdwg.mxu0
    %v565 = vsel %vm468, %v490, 0
    %567 = vmatprep.subr.mxu0 0.0
    %568 = vmatpush1.msra.mxu0 %v326
    %569 = vmatprep.subr.mxu0 0.0
    %570 = vmatpush1.msra.mxu0 0.0
    %571 = vmatprep.subr.mxu0 0.0
    %572 = vmatpush1.msra.mxu0 0.0
    %573 = vmatprep.subr.mxu0 0.0
    %574 = vmatpush1.msra.mxu0 0.0
    %575 = vmatprep.subr.mxu0 0.0
    %576 = vmatpush1.msra.mxu0 0.0
    %577 = vmatprep.subr.mxu0 0.0
    %578 = vmatpush1.msra.mxu0 0.0
    %579 = vmatprep.subr.mxu0 0.0
    %580 = vmatpush1.msra.mxu0 0.0
    %581 = vmatprep.subr.mxu0 0.0
    %582 = vmatpush1.msra.mxu0 0.0
    %583 = vmatprep.subr.mxu0 0.0
    %584 = vmatpush1.msra.mxu0 0.0
    %585 = vmatprep.subr.mxu0 0.0
    %586 = vmatpush1.msra.mxu0 0.0
    %587 = vmatprep.subr.mxu0 0.0
    %588 = vmatpush1.msra.mxu0 0.0
    %589 = vmatprep.subr.mxu0 0.0
    %590 = vmatpush1.msra.mxu0 0.0
    %591 = vmatprep.subr.mxu0 0.0
    %592 = vmatpush1.msra.mxu0 0.0
    %593 = vmatprep.subr.mxu0 0.0
    %594 = vmatpush1.msra.mxu0 0.0
    %595 = vmatprep.subr.mxu0 0.0
    %596 = vmatpush1.msra.mxu0 0.0
    %597 = vmatprep.subr.mxu0 0.0
    %598 = vmatpush1.msra.mxu0 0.0
    %599 = vmatprep.subr.mxu0 0.0
    %600 = vmatpush1.msra.mxu0 0.0
    %601 = vmatprep.subr.mxu0 0.0
    %602 = vmatpush1.msra.mxu0 0.0
    %603 = vmatprep.subr.mxu0 0.0
    %604 = vmatpush1.msra.mxu0 0.0
    %605 = vmatprep.subr.mxu0 0.0
    %606 = vmatpush1.msra.mxu0 0.0
    %607 = vmatprep.subr.mxu0 0.0
    %608 = vmatpush1.msra.mxu0 0.0
    %609 = vmatprep.subr.mxu0 0.0
    %610 = vmatpush1.msra.mxu0 0.0
    %611 = vmatprep.subr.mxu0 0.0
    %612 = vmatpush1.msra.mxu0 0.0
    %613 = vmatprep.subr.mxu0 0.0
    %614 = vmatpush1.msra.mxu0 0.0
    %615 = vmatprep.subr.mxu0 0.0
    %616 = vmatpush1.msra.mxu0 0.0
    %617 = vmatprep.subr.mxu0 0.0
    %618 = vmatpush1.msra.mxu0 0.0
    %619 = vmatprep.subr.mxu0 0.0
    %620 = vmatpush1.msra.mxu0 0.0
    %621 = vmatprep.subr.mxu0 0.0
    %622 = vmatpush1.msra.mxu0 0.0
    %623 = vmatprep.subr.mxu0 0.0
    %624 = vmatpush1.msra.mxu0 0.0
    %625 = vmatprep.subr.mxu0 0.0
    %626 = vmatpush1.msra.mxu0 0.0
    %627 = vmatprep.subr.mxu0 0.0
    %628 = vmatpush1.msra.mxu0 0.0
    %629 = vmatprep.subr.mxu0 0.0
    %630 = vmatpush1.msra.mxu0 0.0
    %631 = vmatprep.mubr.f32.mxu0 0.0
    %632 = vmatmul.mubr.f32.gmra.mrb[0].mxu0 %v565
    %v633 = vpop.f32.mrb[0].mxu0
    %v634 = vadd.f32 0.0, %v633
    %v635 = vpop.f32.mrb[0].mxu0
    %636 = vdwg.mxu0
    %v637 = vld [vmem:[%s4] sm:$0x1]
    %v638 = vld [vmem:[%s5] sm:$0x1]
    %v639 = vld [vmem:[%s6] sm:$0x1]
    %v640 = vld [vmem:[%s7] sm:$0x1]
    %v641 = vld [vmem:[%s9] sm:$0x1]
    %v642 = vld [vmem:[%s11] sm:$0x1]
    %643 = vadd.xlane.f32.xlu0 %v561
    %v644 = vpop.xlane.xlu0 %643
    %645 = vadd.xlane.f32.xlu0 %v634
    %v646 = vpop.xlane.xlu0 %645
    %v647 = vrcp.pop 128.0
    %v648 = vmul.f32 %v644, %v647
    %v649 = vmul.f32 %v646, %v647
    %v650 = vsub.f32 %v561, %v648
    %v651 = vsub.f32 %v634, %v649
    %v652 = vmul.f32 %v650, %v650
    %v653 = vmul.f32 %v651, %v651
    %654 = vadd.xlane.f32.xlu0 %v652
    %v655 = vpop.xlane.xlu0 %654
    %656 = vadd.xlane.f32.xlu0 %v653
    %v657 = vpop.xlane.xlu0 %656
    %v658 = vmul.f32 %v655, %v647
    %v659 = vmul.f32 %v657, %v647
    %v660 = vadd.f32 %v658, 1e-05
    %v661 = vadd.f32 %v659, 1e-05
    %v662 = vrsqrt.pop %v660
    %v663 = vrsqrt.pop %v661
    %v664 = vmul.f32 %v650, %v662
    %v665 = vmul.f32 %v651, %v663
    %v667 = vlaneseq
    %v668 = vshrl.u32 %v667, 7
    %v669 = vsub.s32 0, %v668
    %v670 = vrot.slane %v637, %v669
    %v672 = vmul.f32 %v664, %v670
    %v673 = vmul.f32 %v665, %v670
    %v675 = vlaneseq
    %v676 = vshrl.u32 %v675, 7
    %v677 = vsub.s32 0, %v676
    %v678 = vrot.slane %v638, %v677
    %v680 = vadd.f32 %v672, %v678
    %v681 = vadd.f32 %v673, %v678
    %v682 = vld [vmem:[#allocation11] sm:$0xff]
    %v683 = vld [vmem:[#allocation11 + $0x8] sm:$0xff]
    %v684 = vld [vmem:[#allocation11 + $0x10] sm:$0xff]
    %v685 = vld [vmem:[#allocation11 + $0x18] sm:$0xff]
    %v686 = vld [vmem:[#allocation11 + $0x20] sm:$0xff]
    %v687 = vld [vmem:[#allocation11 + $0x28] sm:$0xff]
    %v688 = vld [vmem:[#allocation11 + $0x30] sm:$0xff]
    %v689 = vld [vmem:[#allocation11 + $0x38] sm:$0xff]
    %v690 = vld [vmem:[#allocation11 + $0x40] sm:$0xff]
    %v691 = vld [vmem:[#allocation11 + $0x48] sm:$0xff]
    %v692 = vld [vmem:[#allocation11 + $0x50] sm:$0xff]
    %v693 = vld [vmem:[#allocation11 + $0x58] sm:$0xff]
    %v694 = vld [vmem:[#allocation11 + $0x60] sm:$0xff]
    %v695 = vld [vmem:[#allocation11 + $0x68] sm:$0xff]
    %v696 = vld [vmem:[#allocation11 + $0x70] sm:$0xff]
    %v697 = vld [vmem:[#allocation11 + $0x78] sm:$0xff]
    %v699 = vlaneseq
    %v700 = vshrl.u32 %v699, 7
    %v701 = vsub.s32 0, %v700
    %v702 = vrot.slane %v642, %v701
    %704 = vmatprep.subr.mxu0 0.0
    %705 = vmatpush1.msra.mxu0 %v682
    %706 = vmatprep.subr.mxu0 0.0
    %707 = vmatpush1.msra.mxu0 %v683
    %708 = vmatprep.subr.mxu0 0.0
    %709 = vmatpush1.msra.mxu0 %v684
    %710 = vmatprep.subr.mxu0 0.0
    %711 = vmatpush1.msra.mxu0 %v685
    %712 = vmatprep.subr.mxu0 0.0
    %713 = vmatpush1.msra.mxu0 %v686
    %714 = vmatprep.subr.mxu0 0.0
    %715 = vmatpush1.msra.mxu0 %v687
    %716 = vmatprep.subr.mxu0 0.0
    %717 = vmatpush1.msra.mxu0 %v688
    %718 = vmatprep.subr.mxu0 0.0
    %719 = vmatpush1.msra.mxu0 %v689
    %720 = vmatprep.subr.mxu0 0.0
    %721 = vmatpush1.msra.mxu0 %v690
    %722 = vmatprep.subr.mxu0 0.0
    %723 = vmatpush1.msra.mxu0 %v691
    %724 = vmatprep.subr.mxu0 0.0
    %725 = vmatpush1.msra.mxu0 %v692
    %726 = vmatprep.subr.mxu0 0.0
    %727 = vmatpush1.msra.mxu0 %v693
    %728 = vmatprep.subr.mxu0 0.0
    %729 = vmatpush1.msra.mxu0 %v694
    %730 = vmatprep.subr.mxu0 0.0
    %731 = vmatpush1.msra.mxu0 %v695
    %732 = vmatprep.subr.mxu0 0.0
    %733 = vmatpush1.msra.mxu0 %v696
    %734 = vmatprep.subr.mxu0 0.0
    %735 = vmatpush1.msra.mxu0 %v697
    %736 = vmatprep.subr.mxu0 0.0
    %737 = vmatpush1.msra.mxu0 0.0
    %738 = vmatprep.subr.mxu0 0.0
    %739 = vmatpush1.msra.mxu0 0.0
    %740 = vmatprep.subr.mxu0 0.0
    %741 = vmatpush1.msra.mxu0 0.0
    %742 = vmatprep.subr.mxu0 0.0
    %743 = vmatpush1.msra.mxu0 0.0
    %744 = vmatprep.subr.mxu0 0.0
    %745 = vmatpush1.msra.mxu0 0.0
    %746 = vmatprep.subr.mxu0 0.0
    %747 = vmatpush1.msra.mxu0 0.0
    %748 = vmatprep.subr.mxu0 0.0
    %749 = vmatpush1.msra.mxu0 0.0
    %750 = vmatprep.subr.mxu0 0.0
    %751 = vmatpush1.msra.mxu0 0.0
    %752 = vmatprep.subr.mxu0 0.0
    %753 = vmatpush1.msra.mxu0 0.0
    %754 = vmatprep.subr.mxu0 0.0
    %755 = vmatpush1.msra.mxu0 0.0
    %756 = vmatprep.subr.mxu0 0.0
    %757 = vmatpush1.msra.mxu0 0.0
    %758 = vmatprep.subr.mxu0 0.0
    %759 = vmatpush1.msra.mxu0 0.0
    %760 = vmatprep.subr.mxu0 0.0
    %761 = vmatpush1.msra.mxu0 0.0
    %762 = vmatprep.subr.mxu0 0.0
    %763 = vmatpush1.msra.mxu0 0.0
    %764 = vmatprep.subr.mxu0 0.0
    %765 = vmatpush1.msra.mxu0 0.0
    %766 = vmatprep.subr.mxu0 0.0
    %767 = vmatpush1.msra.mxu0 0.0
    %768 = vmatprep.mubr.f32.mxu0 0.0
    %769 = vmatmul.mubr.f32.gmra.mrb[0].mxu0 %v680
    %v770 = vpop.f32.mrb[0].mxu0
    %v771 = vadd.f32 %v702, %v770
    %v772 = vpop.f32.mrb[0].mxu0
    %773 = vmatprep.mubr.f32.mxu0 0.0
    %774 = vmatmul.mubr.f32.gmra.mrb[0].mxu0 %v681
    %v775 = vpop.f32.mrb[0].mxu0
    %v776 = vadd.f32 %v702, %v775
    %v777 = vpop.f32.mrb[0].mxu0
    %778 = vdwg.mxu0
    %779 = vadd.xlane.f32.xlu0 %v680
    %v780 = vpop.xlane.xlu0 %779
    %781 = vadd.xlane.f32.xlu0 %v681
    %v782 = vpop.xlane.xlu0 %781
    %v783 = vmul.f32 %v780, %v647
    %v784 = vmul.f32 %v782, %v647
    %v785 = vsub.f32 %v680, %v783
    %v786 = vsub.f32 %v681, %v784
    %v787 = vmul.f32 %v785, %v785
    %v788 = vmul.f32 %v786, %v786
    %789 = vadd.xlane.f32.xlu0 %v787
    %v790 = vpop.xlane.xlu0 %789
    %791 = vadd.xlane.f32.xlu0 %v788
    %v792 = vpop.xlane.xlu0 %791
    %v793 = vmul.f32 %v790, %v647
    %v794 = vmul.f32 %v792, %v647
    %v795 = vadd.f32 %v793, 1e-05
    %v796 = vadd.f32 %v794, 1e-05
    %v797 = vrsqrt.pop %v795
    %v798 = vrsqrt.pop %v796
    %v799 = vmul.f32 %v785, %v797
    %v800 = vmul.f32 %v786, %v798
    %v802 = vlaneseq
    %v803 = vshrl.u32 %v802, 7
    %v804 = vsub.s32 0, %v803
    %v805 = vrot.slane %v639, %v804
    %v807 = vmul.f32 %v799, %v805
    %v808 = vmul.f32 %v800, %v805
    %v810 = vlaneseq
    %v811 = vshrl.u32 %v810, 7
    %v812 = vsub.s32 0, %v811
    %v813 = vrot.slane %v640, %v812
    %v815 = vadd.f32 %v807, %v813
    %v816 = vadd.f32 %v808, %v813
    %v817 = vadd.f32 %v771, %v815
    %v818 = vadd.f32 %v776, %v816
    %v819 = vld [vmem:[#allocation10] sm:$0xff]
    %v820 = vld [vmem:[#allocation10 + $0x8] sm:$0xff]
    %v821 = vld [vmem:[#allocation10 + $0x10] sm:$0xff]
    %v822 = vld [vmem:[#allocation10 + $0x18] sm:$0xff]
    %v823 = vld [vmem:[#allocation10 + $0x20] sm:$0xff]
    %v824 = vld [vmem:[#allocation10 + $0x28] sm:$0xff]
    %v825 = vld [vmem:[#allocation10 + $0x30] sm:$0xff]
    %v826 = vld [vmem:[#allocation10 + $0x38] sm:$0xff]
    %v827 = vld [vmem:[#allocation10 + $0x40] sm:$0xff]
    %v828 = vld [vmem:[#allocation10 + $0x48] sm:$0xff]
    %v829 = vld [vmem:[#allocation10 + $0x50] sm:$0xff]
    %v830 = vld [vmem:[#allocation10 + $0x58] sm:$0xff]
    %v831 = vld [vmem:[#allocation10 + $0x60] sm:$0xff]
    %v832 = vld [vmem:[#allocation10 + $0x68] sm:$0xff]
    %v833 = vld [vmem:[#allocation10 + $0x70] sm:$0xff]
    %v834 = vld [vmem:[#allocation10 + $0x78] sm:$0xff]
    %v836 = vlaneseq
    %v837 = vshrl.u32 %v836, 7
    %v838 = vsub.s32 0, %v837
    %v839 = vrot.slane %v641, %v838
    %841 = vmatprep.subr.mxu0 0.0
    %842 = vmatpush1.msra.mxu0 %v819
    %843 = vmatprep.subr.mxu0 0.0
    %844 = vmatpush1.msra.mxu0 %v820
    %845 = vmatprep.subr.mxu0 0.0
    %846 = vmatpush1.msra.mxu0 %v821
    %847 = vmatprep.subr.mxu0 0.0
    %848 = vmatpush1.msra.mxu0 %v822
    %849 = vmatprep.subr.mxu0 0.0
    %850 = vmatpush1.msra.mxu0 %v823
    %851 = vmatprep.subr.mxu0 0.0
    %852 = vmatpush1.msra.mxu0 %v824
    %853 = vmatprep.subr.mxu0 0.0
    %854 = vmatpush1.msra.mxu0 %v825
    %855 = vmatprep.subr.mxu0 0.0
    %856 = vmatpush1.msra.mxu0 %v826
    %857 = vmatprep.subr.mxu0 0.0
    %858 = vmatpush1.msra.mxu0 %v827
    %859 = vmatprep.subr.mxu0 0.0
    %860 = vmatpush1.msra.mxu0 %v828
    %861 = vmatprep.subr.mxu0 0.0
    %862 = vmatpush1.msra.mxu0 %v829
    %863 = vmatprep.subr.mxu0 0.0
    %864 = vmatpush1.msra.mxu0 %v830
    %865 = vmatprep.subr.mxu0 0.0
    %866 = vmatpush1.msra.mxu0 %v831
    %867 = vmatprep.subr.mxu0 0.0
    %868 = vmatpush1.msra.mxu0 %v832
    %869 = vmatprep.subr.mxu0 0.0
    %870 = vmatpush1.msra.mxu0 %v833
    %871 = vmatprep.subr.mxu0 0.0
    %872 = vmatpush1.msra.mxu0 %v834
    %873 = vmatprep.subr.mxu0 0.0
    %874 = vmatpush1.msra.mxu0 0.0
    %875 = vmatprep.subr.mxu0 0.0
    %876 = vmatpush1.msra.mxu0 0.0
    %877 = vmatprep.subr.mxu0 0.0
    %878 = vmatpush1.msra.mxu0 0.0
    %879 = vmatprep.subr.mxu0 0.0
    %880 = vmatpush1.msra.mxu0 0.0
    %881 = vmatprep.subr.mxu0 0.0
    %882 = vmatpush1.msra.mxu0 0.0
    %883 = vmatprep.subr.mxu0 0.0
    %884 = vmatpush1.msra.mxu0 0.0
    %885 = vmatprep.subr.mxu0 0.0
    %886 = vmatpush1.msra.mxu0 0.0
    %887 = vmatprep.subr.mxu0 0.0
    %888 = vmatpush1.msra.mxu0 0.0
    %889 = vmatprep.subr.mxu0 0.0
    %890 = vmatpush1.msra.mxu0 0.0
    %891 = vmatprep.subr.mxu0 0.0
    %892 = vmatpush1.msra.mxu0 0.0
    %893 = vmatprep.subr.mxu0 0.0
    %894 = vmatpush1.msra.mxu0 0.0
    %895 = vmatprep.subr.mxu0 0.0
    %896 = vmatpush1.msra.mxu0 0.0
    %897 = vmatprep.subr.mxu0 0.0
    %898 = vmatpush1.msra.mxu0 0.0
    %899 = vmatprep.subr.mxu0 0.0
    %900 = vmatpush1.msra.mxu0 0.0
    %901 = vmatprep.subr.mxu0 0.0
    %902 = vmatpush1.msra.mxu0 0.0
    %903 = vmatprep.subr.mxu0 0.0
    %904 = vmatpush1.msra.mxu0 0.0
    %905 = vmatprep.mubr.f32.mxu0 0.0
    %906 = vmatmul.mubr.f32.gmra.mrb[0].mxu0 %v817
    %v907 = vpop.f32.mrb[0].mxu0
    %v908 = vadd.f32 %v839, %v907
    %v909 = vpop.f32.mrb[0].mxu0
    %910 = vmatprep.mubr.f32.mxu0 0.0
    %911 = vmatmul.mubr.f32.gmra.mrb[0].mxu0 %v818
    %v912 = vpop.f32.mrb[0].mxu0
    %v913 = vadd.f32 %v839, %v912
    %v914 = vpop.f32.mrb[0].mxu0
    %915 = vdwg.mxu0
    %v916 = vadd.f32 %v908, %v126
    %v917 = vadd.f32 %v913, %v127
    %918 = vmatprep.subr.mxu0 0.0
    %919 = vmatpush1.msra.mxu0 %v819
    %920 = vmatprep.subr.mxu0 0.0
    %921 = vmatpush1.msra.mxu0 %v820
    %922 = vmatprep.subr.mxu0 0.0
    %923 = vmatpush1.msra.mxu0 %v821
    %924 = vmatprep.subr.mxu0 0.0
    %925 = vmatpush1.msra.mxu0 %v822
    %926 = vmatprep.subr.mxu0 0.0
    %927 = vmatpush1.msra.mxu0 %v823
    %928 = vmatprep.subr.mxu0 0.0
    %929 = vmatpush1.msra.mxu0 %v824
    %930 = vmatprep.subr.mxu0 0.0
    %931 = vmatpush1.msra.mxu0 %v825
    %932 = vmatprep.subr.mxu0 0.0
    %933 = vmatpush1.msra.mxu0 %v826
    %934 = vmatprep.subr.mxu0 0.0
    %935 = vmatpush1.msra.mxu0 %v827
    %936 = vmatprep.subr.mxu0 0.0
    %937 = vmatpush1.msra.mxu0 %v828
    %938 = vmatprep.subr.mxu0 0.0
    %939 = vmatpush1.msra.mxu0 %v829
    %940 = vmatprep.subr.mxu0 0.0
    %941 = vmatpush1.msra.mxu0 %v830
    %942 = vmatprep.subr.mxu0 0.0
    %943 = vmatpush1.msra.mxu0 %v831
    %944 = vmatprep.subr.mxu0 0.0
    %945 = vmatpush1.msra.mxu0 %v832
    %946 = vmatprep.subr.mxu0 0.0
    %947 = vmatpush1.msra.mxu0 %v833
    %948 = vmatprep.subr.mxu0 0.0
    %949 = vmatpush1.msra.mxu0 %v834
    %950 = vmatprep.subr.mxu0 0.0
    %951 = vmatpush1.msra.mxu0 0.0
    %952 = vmatprep.subr.mxu0 0.0
    %953 = vmatpush1.msra.mxu0 0.0
    %954 = vmatprep.subr.mxu0 0.0
    %955 = vmatpush1.msra.mxu0 0.0
    %956 = vmatprep.subr.mxu0 0.0
    %957 = vmatpush1.msra.mxu0 0.0
    %958 = vmatprep.subr.mxu0 0.0
    %959 = vmatpush1.msra.mxu0 0.0
    %960 = vmatprep.subr.mxu0 0.0
    %961 = vmatpush1.msra.mxu0 0.0
    %962 = vmatprep.subr.mxu0 0.0
    %963 = vmatpush1.msra.mxu0 0.0
    %964 = vmatprep.subr.mxu0 0.0
    %965 = vmatpush1.msra.mxu0 0.0
    %966 = vmatprep.subr.mxu0 0.0
    %967 = vmatpush1.msra.mxu0 0.0
    %968 = vmatprep.subr.mxu0 0.0
    %969 = vmatpush1.msra.mxu0 0.0
    %970 = vmatprep.subr.mxu0 0.0
    %971 = vmatpush1.msra.mxu0 0.0
    %972 = vmatprep.subr.mxu0 0.0
    %973 = vmatpush1.msra.mxu0 0.0
    %974 = vmatprep.subr.mxu0 0.0
    %975 = vmatpush1.msra.mxu0 0.0
    %976 = vmatprep.subr.mxu0 0.0
    %977 = vmatpush1.msra.mxu0 0.0
    %978 = vmatprep.subr.mxu0 0.0
    %979 = vmatpush1.msra.mxu0 0.0
    %980 = vmatprep.subr.mxu0 0.0
    %981 = vmatpush1.msra.mxu0 0.0
    %982 = vmatprep.mubr.f32.mxu0 0.0
    %983 = vmatmul.mubr.f32.gmra.mrb[0].mxu0 %v916
    %v984 = vpop.f32.mrb[0].mxu0
    %v985 = vadd.f32 %v839, %v984
    %v986 = vpop.f32.mrb[0].mxu0
    %987 = vmatprep.mubr.f32.mxu0 0.0
    %988 = vmatmul.mubr.f32.gmra.mrb[0].mxu0 %v917
    %v989 = vpop.f32.mrb[0].mxu0
    %v990 = vadd.f32 %v839, %v989
    %v991 = vpop.f32.mrb[0].mxu0
    %992 = vdwg.mxu0
    %993 = vst [vmem:[#allocation13] sm:$0xff] %v985
    %994 = vst [vmem:[#allocation13 + $0x8] sm:$0xff] %v990
    // Predicated region
    $region74: #{tpu_custom_call.1} parent=1 // pred_check
      _
    $region75: #{tpu_custom_call.1} parent=1 // pred_check_branch
      %996 = sbr.rel (0) target = $region77
    $region76: #{tpu_custom_call.1} parent=1 // pred_region
      %s998 = ssub.s32 256, 256
      %999 = vsyncadd [#allocation4], %s998
      %s1000 = sshll.u32 [#allocation13], 4
      %s1001 = int_to_ptr.vmem [resolvable:$true] %s1000
      %1006 = dma.vmem_to_hbm [thread:$0]  %s1001, 256, %s12, [#allocation4], 128, 128, 8
    $region77: #{tpu_custom_call.1} parent=1 // pred_fallthru
      _
    // Predicated region
    $region78: #{tpu_custom_call.1} parent=1 // pred_check
      _
    $region79: #{tpu_custom_call.1} parent=1 // pred_check_branch
      %1008 = sbr.rel (0) target = $region81
    $region80: #{tpu_custom_call.1} parent=1 // pred_region
      %1009 = dma.done [#allocation4], 256
    $region81: #{tpu_custom_call.1} parent=1 // pred_fallthru
      _
    %1010 = vsyncpa [#allocation3], 1
    %1011 = vsyncpa [#allocation6], 1
    %1012 = vsyncpa [#allocation9], 1
    %1013 = vsyncpa [#allocation12], 1
    %1014 = vsyncpa [#allocation4], 1

</llo_original>
